<compile_context>
chip_gen: v6e
topology: v6e:2x2x1
jax: 0.10.0
libtpu: 0.0.40
codegen_flags: <defaults>
</compile_context>

<pallas_src>
import functools
from typing import NamedTuple

import jax
import jax.numpy as jnp
from jax.experimental import pallas as pl
from jax.experimental.pallas import tpu as pltpu


# ---------------------------------------------------------------------------
# helpers
# ---------------------------------------------------------------------------
def _round_up(n, m):
    return ((n + m - 1) // m) * m


def _pad_to(a, shape):
    pads = [(0, t - s) for s, t in zip(a.shape, shape)]
    if all(p == (0, 0) for p in pads):
        return a
    return jnp.pad(a, pads)


def _resident_spec(block_shape, index_map):
    """BlockSpec for weights/biases whose block index never changes.

    Single-buffer them (Buffered(1)): default 2-deep pipelining would only
    double their VMEM residency for zero overlap benefit.
    """
    try:
        return pl.BlockSpec(block_shape, index_map,
                            pipeline_mode=pl.Buffered(1))
    except (TypeError, AttributeError):   # older jax without pipeline_mode
        return pl.BlockSpec(block_shape, index_map)


_UNROLL_MAX_LAYERS = 4   # static unroll up to this depth (helps LLO scheduler)


# ---------------------------------------------------------------------------
# Pallas kernels: the full MLP chain (1x1 convs == per-row matmuls) per tile
# ---------------------------------------------------------------------------
def _tsmixer_kernel(num_layers,
                    x_ref,        # (TM, Fp)      VMEM, compute dtype
                    w_in_ref,     # (Fp, Hp)      VMEM, compute dtype
                    b_in_ref,     # (1, Hp)       VMEM, f32
                    w_hid_ref,    # (L, Hp, Hp)   VMEM, compute dtype
                    b_hid_ref,    # (L, 1, Hp)    VMEM, f32
                    w_out_ref,    # (Hp, Op)      VMEM, compute dtype
                    b_out_ref,    # (1, Op)       VMEM, f32
                    o_ref):       # (TM, Op)      VMEM, out dtype
    compute_dtype = w_in_ref.dtype

    # input projection + ReLU (MXU matmul, f32 accumulate; bias/ReLU in f32)
    h = jnp.dot(x_ref[...], w_in_ref[...], preferred_element_type=jnp.float32)
    h = jnp.maximum(h + b_in_ref[...], 0.0)

    def layer(l, h):
        hh = jnp.dot(h.astype(compute_dtype), w_hid_ref[l],
                     preferred_element_type=jnp.float32)
        return jnp.maximum(hh + b_hid_ref[l], 0.0)

    if num_layers <= _UNROLL_MAX_LAYERS:
        for l in range(num_layers):            # static unroll
            h = layer(l, h)
    else:
        # bound code size / vreg live ranges at large L
        h = jax.lax.fori_loop(0, num_layers, layer, h)

    # output projection (no activation), lane-dense store
    out = jnp.dot(h.astype(compute_dtype), w_out_ref[...],
                  preferred_element_type=jnp.float32)
    o_ref[...] = (out + b_out_ref[...]).astype(o_ref.dtype)


def _tsmixer_stream_kernel(num_layers,
                           x_ref,        # (TM, Fp)      VMEM, compute dtype
                           w_in_ref,     # (Fp, Hp)      VMEM, compute dtype
                           b_in_ref,     # (1, Hp)       VMEM, f32
                           w_hid_hbm,    # (L, Hp, Hp)   HBM (pl.ANY)
                           b_hid_ref,    # (L, 1, Hp)    VMEM, f32
                           w_out_ref,    # (Hp, Op)      VMEM, compute dtype
                           b_out_ref,    # (1, Op)       VMEM, f32
                           o_ref,        # (TM, Op)      VMEM, out dtype
                           w_buf,        # (2, Hp, Hp)   VMEM scratch
                           sem):         # DMA sems (2,)
    """Variant that streams w_hid from HBM one layer at a time
    (double-buffered), for when (L, Hp, Hp) does not comfortably fit VMEM
    (v7x: 64 MiB physical / 32 MiB scoped default)."""
    compute_dtype = w_in_ref.dtype

    if num_layers > 0:
        # prefetch layer 0 weights; overlaps with the input projection
        pltpu.make_async_copy(w_hid_hbm.at[0], w_buf.at[0], sem.at[0]).start()

    h = jnp.dot(x_ref[...], w_in_ref[...], preferred_element_type=jnp.float32)
    h = jnp.maximum(h + b_in_ref[...], 0.0)

    if num_layers > 0:
        def layer(l, h):
            slot = l & 1
            pltpu.make_async_copy(w_hid_hbm.at[0], w_buf.at[slot],
                                  sem.at[slot]).wait()

            @pl.when(l + 1 < num_layers)
            def _():
                pltpu.make_async_copy(w_hid_hbm.at[l + 1], w_buf.at[1 - slot],
                                      sem.at[1 - slot]).start()

            hh = jnp.dot(h.astype(compute_dtype), w_buf[slot],
                         preferred_element_type=jnp.float32)
            return jnp.maximum(hh + b_hid_ref[l], 0.0)

        h = jax.lax.fori_loop(0, num_layers, layer, h)

    out = jnp.dot(h.astype(compute_dtype), w_out_ref[...],
                  preferred_element_type=jnp.float32)
    o_ref[...] = (out + b_out_ref[...]).astype(o_ref.dtype)


# ---------------------------------------------------------------------------
# one-time parameter preparation (pad to lane width, cast to compute dtype)
# ---------------------------------------------------------------------------
class PreparedParams(NamedTuple):
    w_in: jax.Array     # (Fp, Hp)     compute dtype
    b_in: jax.Array     # (1, Hp)      f32
    w_hid: jax.Array    # (L, Hp, Hp)  compute dtype
    b_hid: jax.Array    # (L, 1, Hp)   f32
    w_out: jax.Array    # (Hp, Op)     compute dtype
    b_out: jax.Array    # (1, Op)      f32
    num_layers: int
    F: int
    H: int
    O: int


def prepare_params(params, num_layers, *, compute_dtype=jnp.bfloat16):
    """Pad/cast parameters ONCE (hoisted out of the per-call wrapper)."""
    w_in, b_in, w_hid, b_hid, w_out, b_out = params
    F, H = w_in.shape
    O = w_out.shape[1]
    L = w_hid.shape[0]
    Fp, Hp, Op = _round_up(F, 128), _round_up(H, 128), _round_up(O, 128)
    return PreparedParams(
        w_in=_pad_to(w_in, (Fp, Hp)).astype(compute_dtype),
        b_in=_pad_to(b_in, (1, Hp)).astype(jnp.float32),
        w_hid=_pad_to(w_hid, (L, Hp, Hp)).astype(compute_dtype),
        b_hid=_pad_to(b_hid, (L, 1, Hp)).astype(jnp.float32),
        w_out=_pad_to(w_out, (Hp, Op)).astype(compute_dtype),
        b_out=_pad_to(b_out, (1, Op)).astype(jnp.float32),
        num_layers=num_layers, F=F, H=H, O=O)


# ---------------------------------------------------------------------------
# wrapper: replicates TSMixer.forward
# ---------------------------------------------------------------------------
def tsmixer_forward(x, prepared: PreparedParams, *, tile_m=512,
                    out_dtype=None, stream_w_hid=None, vmem_limit_bytes=None):
    """x: (B, T, F) or (B, F) -> (B, output_size) in out_dtype
    (default: the compute dtype the params were prepared with)."""
    if x.ndim == 2:
        x = x[:, None, :]                      # unsqueeze(1) -> (B, 1, F)
    x_last = x[:, -1, :]                       # only the last step is returned
    B, F = x_last.shape
    assert F == prepared.F, (F, prepared.F)

    compute_dtype = prepared.w_in.dtype
    out_dtype = compute_dtype if out_dtype is None else out_dtype
    csize = jnp.dtype(compute_dtype).itemsize
    osize = jnp.dtype(out_dtype).itemsize

    Fp, Hp = prepared.w_in.shape
    Op = prepared.w_out.shape[1]
    L = prepared.w_hid.shape[0]
    num_layers = prepared.num_layers

    # --- row tiling -------------------------------------------------------
    # sublane alignment (16 rows when any sub-32-bit dtype is streamed)
    row_align = 16 if min(csize, osize) < 4 else 8
    tile_m = max(row_align, _round_up(tile_m, row_align))
    M_pad = _round_up(B, row_align)
    if M_pad > row_align:
        # v7x megacore: make sure the 'parallel' grid axis has >= 2 steps
        tm_half = _round_up(-(-M_pad // 2), row_align)
        TM = min(tile_m, tm_half)
    else:
        TM = min(tile_m, M_pad)
    M_pad = _round_up(M_pad, TM)

    x_p = _pad_to(x_last, (M_pad, Fp)).astype(compute_dtype)

    # --- w_hid residency decision ------------------------------------------
    w_hid_bytes = L * Hp * Hp * csize
    if stream_w_hid is None:
        stream_w_hid = num_layers > 0 and w_hid_bytes > 16 * 1024 * 1024

    # --- scoped-VMEM budget (v5e default is only 16 MiB; raise explicitly) --
    if vmem_limit_bytes is None:
        need = (2 * TM * Fp * csize              # x tile, double-buffered
                + 2 * TM * Op * osize            # out tile, double-buffered
                + 4 * TM * Hp * 4                # f32 h intermediates
                + (Fp * Hp + Hp * Op) * csize    # resident projections
                + (Hp + Op + L * Hp) * 4)        # resident f32 biases
        need += (2 * Hp * Hp * csize) if stream_w_hid else w_hid_bytes
        # cap auto value at 64 MiB (v7x physical); pass explicitly for more.
        vmem_limit_bytes = min(64 * 1024 * 1024,
                               max(32 * 1024 * 1024, int(need * 1.5)))

    in_specs = [
        pl.BlockSpec((TM, Fp), lambda i: (i, 0)),              # x (streamed)
        _resident_spec((Fp, Hp), lambda i: (0, 0)),            # w_in
        _resident_spec((1, Hp), lambda i: (0, 0)),              # b_in
        None,                                                   # w_hid (below)
        _resident_spec((L, 1, Hp), lambda i: (0, 0, 0)),        # b_hid
        _resident_spec((Hp, Op), lambda i: (0, 0)),             # w_out
        _resident_spec((1, Op), lambda i: (0, 0)),              # b_out
    ]

    if stream_w_hid:
        kernel = functools.partial(_tsmixer_stream_kernel, num_layers)
        in_specs[3] = pl.BlockSpec(memory_space=pl.ANY)         # stays in HBM
        scratch_shapes = [pltpu.VMEM((2, Hp, Hp), compute_dtype),
                          pltpu.SemaphoreType.DMA((2,))]
    else:
        kernel = functools.partial(_tsmixer_kernel, num_layers)
        in_specs[3] = _resident_spec((L, Hp, Hp), lambda i: (0, 0, 0))
        scratch_shapes = []

    out_p = pl.pallas_call(
        kernel,
        out_shape=jax.ShapeDtypeStruct((M_pad, Op), out_dtype),
        grid=(M_pad // TM,),
        in_specs=in_specs,
        out_specs=pl.BlockSpec((TM, Op), lambda i: (i, 0)),
        scratch_shapes=scratch_shapes,
        compiler_params=pltpu.CompilerParams(
            dimension_semantics=("parallel",),
            vmem_limit_bytes=vmem_limit_bytes),
    )(x_p, prepared.w_in, prepared.b_in, prepared.w_hid, prepared.b_hid,
      prepared.w_out, prepared.b_out)

    return out_p[:B, :prepared.O]


# ---------------------------------------------------------------------------
# Deterministic parameter init (shapes follow nn.Conv1d(in, out, kernel_size=1))
# Conv1d weight (out, in, 1) is stored transposed as (in, out) for row matmul.
# ---------------------------------------------------------------------------
def init_params(key, input_size, hidden_size, num_layers, output_size):
    keys = jax.random.split(key, 6)
    scale = 0.1
    w_in = scale * jax.random.normal(keys[0], (input_size, hidden_size), jnp.float32)
    b_in = scale * jax.random.normal(keys[1], (1, hidden_size), jnp.float32)
    w_hid = scale * jax.random.normal(
        keys[2], (max(num_layers, 1), hidden_size, hidden_size), jnp.float32)
    b_hid = scale * jax.random.normal(
        keys[3], (max(num_layers, 1), 1, hidden_size), jnp.float32)
    w_out = scale * jax.random.normal(keys[4], (hidden_size, output_size), jnp.float32)
    b_out = scale * jax.random.normal(keys[5], (1, output_size), jnp.float32)
    return (w_in, b_in, w_hid, b_hid, w_out, b_out)


# Pure-JAX reference (mirrors the PyTorch forward).
def tsmixer_ref(x, params, *, num_layers):
    if x.ndim == 2:
        x = x[:, None, :]
    w_in, b_in, w_hid, b_hid, w_out, b_out = params
    h = jnp.maximum(jnp.einsum('btf,fh->bth', x, w_in) + b_in[0], 0.0)
    for l in range(num_layers):
        h = jnp.maximum(jnp.einsum('bth,hk->btk', h, w_hid[l]) + b_hid[l, 0], 0.0)
    out = jnp.einsum('bth,ho->bto', h, w_out) + b_out[0]
    return out[:, -1, :]


if __name__ == "__main__":
    # Small shapes consistent with the module's forward:
    # batch=2, seq=8, input_size=4, hidden_size=32, num_layers=2, output_size=4
    B, T = 2, 8
    input_size, hidden_size, num_layers, output_size = 4, 32, 2, 4

    key = jax.random.PRNGKey(0)
    k_x, k_p = jax.random.split(key)
    x = jax.random.normal(k_x, (B, T, input_size), jnp.float32)
    params = init_params(k_p, input_size, hidden_size, num_layers, output_size)
    y_ref = tsmixer_ref(x, params, num_layers=num_layers)

    # f32 path (tight check against reference)
    prep_f32 = prepare_params(params, num_layers, compute_dtype=jnp.float32)
    y = jax.block_until_ready(tsmixer_forward(x, prep_f32, out_dtype=jnp.float32))
    assert y.shape == (B, output_size), y.shape
    assert jnp.allclose(y, y_ref, atol=1e-5, rtol=1e-5), (y, y_ref)

    # 2-D input path (covers the unsqueeze branch)
    x2d = x[:, -1, :]
    y2d = jax.block_until_ready(
        tsmixer_forward(x2d, prep_f32, out_dtype=jnp.float32))
    y2d_ref = tsmixer_ref(x2d, params, num_layers=num_layers)
    assert jnp.allclose(y2d, y2d_ref, atol=1e-5, rtol=1e-5), (y2d, y2d_ref)

    # default bf16 streaming path (bf16 x/weights/output, f32 accumulate)
    prep_bf16 = prepare_params(params, num_layers)     # compute_dtype=bfloat16
    y_bf16 = jax.block_until_ready(tsmixer_forward(x, prep_bf16))
    assert y_bf16.dtype == jnp.bfloat16, y_bf16.dtype
    assert jnp.allclose(y_bf16.astype(jnp.float32), y_ref,
                        atol=1e-1, rtol=1e-1), (y_bf16, y_ref)

    # deeper model: exercises the fori_loop (non-unrolled) resident path
    deep_layers = 6
    params_deep = init_params(k_p, input_size, hidden_size, deep_layers,
                              output_size)
    y_deep_ref = tsmixer_ref(x, params_deep, num_layers=deep_layers)
    prep_deep = prepare_params(params_deep, deep_layers,
                               compute_dtype=jnp.float32)
    y_deep = jax.block_until_ready(
        tsmixer_forward(x, prep_deep, out_dtype=jnp.float32))
    assert jnp.allclose(y_deep, y_deep_ref, atol=1e-5, rtol=1e-5), (
        y_deep, y_deep_ref)

    # forced w_hid-streaming path (manual double-buffered HBM->VMEM DMA)
    y_stream = jax.block_until_ready(
        tsmixer_forward(x, prep_deep, out_dtype=jnp.float32,
                        stream_w_hid=True))
    assert jnp.allclose(y_stream, y_deep_ref, atol=1e-5, rtol=1e-5), (
        y_stream, y_deep_ref)

    print("KERNEL_OK")
</pallas_src>

<mosaic_0001>
module attributes {stable_mosaic.version = 11 : i64} {
  func.func @_tsmixer_kernel(%arg0: i32, %arg1: memref<8x128xf32, #tpu.memory_space<vmem>>, %arg2: memref<128x128xf32, #tpu.memory_space<vmem>>, %arg3: memref<1x128xf32, #tpu.memory_space<vmem>>, %arg4: memref<2x128x128xf32, #tpu.memory_space<vmem>>, %arg5: memref<2x1x128xf32, #tpu.memory_space<vmem>>, %arg6: memref<128x128xf32, #tpu.memory_space<vmem>>, %arg7: memref<1x128xf32, #tpu.memory_space<vmem>>, %arg8: memref<8x128xf32, #tpu.memory_space<vmem>>) attributes {dimension_semantics = [#tpu.dimension_semantics<parallel>], iteration_bounds = array<i64: 1>, scalar_prefetch = 0 : i64, scratch_operands = 0 : i64, tpu.core_type = #tpu.core_type<tc>, window_params = [{transform_indices = @transform_0, window_bounds = array<i64: 8, 128>}, {pipeline_mode = #tpu.pipeline_mode<synchronous>, transform_indices = @transform_1, window_bounds = array<i64: 128, 128>}, {pipeline_mode = #tpu.pipeline_mode<synchronous>, transform_indices = @transform_2, window_bounds = array<i64: 1, 128>}, {pipeline_mode = #tpu.pipeline_mode<synchronous>, transform_indices = @transform_3, window_bounds = array<i64: 2, 128, 128>}, {pipeline_mode = #tpu.pipeline_mode<synchronous>, transform_indices = @transform_4, window_bounds = array<i64: 2, 1, 128>}, {pipeline_mode = #tpu.pipeline_mode<synchronous>, transform_indices = @transform_5, window_bounds = array<i64: 128, 128>}, {pipeline_mode = #tpu.pipeline_mode<synchronous>, transform_indices = @transform_6, window_bounds = array<i64: 1, 128>}, {transform_indices = @transform_7, window_bounds = array<i64: 8, 128>}]} {
    %c0 = arith.constant 0 : index
    %c0_0 = arith.constant 0 : index
    %0 = vector.load %arg1[%c0, %c0_0] : memref<8x128xf32, #tpu.memory_space<vmem>>, vector<8x128xf32>
    %c0_1 = arith.constant 0 : index
    %c0_2 = arith.constant 0 : index
    %1 = vector.load %arg2[%c0_1, %c0_2] : memref<128x128xf32, #tpu.memory_space<vmem>>, vector<128x128xf32>
    %cst = arith.constant dense<0.000000e+00> : vector<8x128xf32>
    %2 = tpu.matmul %0, %1, %cst {dimension_numbers = #tpu.dot_dimension_numbers<[1], [0], [0], [1], [0, 0, 1, 1], [], []>} : vector<8x128xf32>, vector<128x128xf32>, vector<8x128xf32> -> vector<8x128xf32>
    %c0_3 = arith.constant 0 : index
    %c0_4 = arith.constant 0 : index
    %3 = vector.load %arg3[%c0_3, %c0_4] : memref<1x128xf32, #tpu.memory_space<vmem>>, vector<1x128xf32>
    %4 = vector.broadcast %3 : vector<1x128xf32> to vector<8x128xf32>
    %5 = arith.addf %2, %4 : vector<8x128xf32>
    %cst_5 = arith.constant 0.000000e+00 : f32
    %6 = vector.broadcast %cst_5 : f32 to vector<8x128xf32>
    %7 = arith.maximumf %5, %6 : vector<8x128xf32>
    %c0_6 = arith.constant 0 : index
    %c0_7 = arith.constant 0 : index
    %c0_8 = arith.constant 0 : index
    %8 = vector.load %arg4[%c0_6, %c0_7, %c0_8] : memref<2x128x128xf32, #tpu.memory_space<vmem>>, vector<1x128x128xf32>
    %9 = vector.shape_cast %8 : vector<1x128x128xf32> to vector<128x128xf32>
    %cst_9 = arith.constant dense<0.000000e+00> : vector<8x128xf32>
    %10 = tpu.matmul %7, %9, %cst_9 {dimension_numbers = #tpu.dot_dimension_numbers<[1], [0], [0], [1], [0, 0, 1, 1], [], []>} : vector<8x128xf32>, vector<128x128xf32>, vector<8x128xf32> -> vector<8x128xf32>
    %c0_10 = arith.constant 0 : index
    %c0_11 = arith.constant 0 : index
    %c0_12 = arith.constant 0 : index
    %11 = vector.load %arg5[%c0_10, %c0_11, %c0_12] : memref<2x1x128xf32, #tpu.memory_space<vmem>>, vector<1x1x128xf32>
    %12 = vector.shape_cast %11 : vector<1x1x128xf32> to vector<1x128xf32>
    %13 = vector.broadcast %12 : vector<1x128xf32> to vector<8x128xf32>
    %14 = arith.addf %10, %13 : vector<8x128xf32>
    %cst_13 = arith.constant 0.000000e+00 : f32
    %15 = vector.broadcast %cst_13 : f32 to vector<8x128xf32>
    %16 = arith.maximumf %14, %15 : vector<8x128xf32>
    %c1 = arith.constant 1 : index
    %c0_14 = arith.constant 0 : index
    %c0_15 = arith.constant 0 : index
    %17 = vector.load %arg4[%c1, %c0_14, %c0_15] : memref<2x128x128xf32, #tpu.memory_space<vmem>>, vector<1x128x128xf32>
    %18 = vector.shape_cast %17 : vector<1x128x128xf32> to vector<128x128xf32>
    %cst_16 = arith.constant dense<0.000000e+00> : vector<8x128xf32>
    %19 = tpu.matmul %16, %18, %cst_16 {dimension_numbers = #tpu.dot_dimension_numbers<[1], [0], [0], [1], [0, 0, 1, 1], [], []>} : vector<8x128xf32>, vector<128x128xf32>, vector<8x128xf32> -> vector<8x128xf32>
    %c1_17 = arith.constant 1 : index
    %c0_18 = arith.constant 0 : index
    %c0_19 = arith.constant 0 : index
    %20 = vector.load %arg5[%c1_17, %c0_18, %c0_19] : memref<2x1x128xf32, #tpu.memory_space<vmem>>, vector<1x1x128xf32>
    %21 = vector.shape_cast %20 : vector<1x1x128xf32> to vector<1x128xf32>
    %22 = vector.broadcast %21 : vector<1x128xf32> to vector<8x128xf32>
    %23 = arith.addf %19, %22 : vector<8x128xf32>
    %cst_20 = arith.constant 0.000000e+00 : f32
    %24 = vector.broadcast %cst_20 : f32 to vector<8x128xf32>
    %25 = arith.maximumf %23, %24 : vector<8x128xf32>
    %c0_21 = arith.constant 0 : index
    %c0_22 = arith.constant 0 : index
    %26 = vector.load %arg6[%c0_21, %c0_22] : memref<128x128xf32, #tpu.memory_space<vmem>>, vector<128x128xf32>
    %cst_23 = arith.constant dense<0.000000e+00> : vector<8x128xf32>
    %27 = tpu.matmul %25, %26, %cst_23 {dimension_numbers = #tpu.dot_dimension_numbers<[1], [0], [0], [1], [0, 0, 1, 1], [], []>} : vector<8x128xf32>, vector<128x128xf32>, vector<8x128xf32> -> vector<8x128xf32>
    %c0_24 = arith.constant 0 : index
    %c0_25 = arith.constant 0 : index
    %28 = vector.load %arg7[%c0_24, %c0_25] : memref<1x128xf32, #tpu.memory_space<vmem>>, vector<1x128xf32>
    %29 = vector.broadcast %28 : vector<1x128xf32> to vector<8x128xf32>
    %30 = arith.addf %27, %29 : vector<8x128xf32>
    %c0_26 = arith.constant 0 : index
    %c0_27 = arith.constant 0 : index
    %31 = vector.load %arg8[%c0_26, %c0_27] : memref<8x128xf32, #tpu.memory_space<vmem>>, vector<8x128xf32>
    tpu.vector_store %arg8[%c0_26, %c0_27], %30 {strides = array<i32>} : memref<8x128xf32, #tpu.memory_space<vmem>>, vector<8x128xf32>,
    return
  }
  func.func @transform_0(%arg0: i32) -> (i32, i32) {
    %c0_i32 = arith.constant 0 : i32
    %c0_i32_0 = arith.constant 0 : i32
    return %arg0, %c0_i32 : i32, i32
  }
  func.func @transform_1(%arg0: i32) -> (i32, i32) {
    %c0_i32 = arith.constant 0 : i32
    %c0_i32_0 = arith.constant 0 : i32
    %c0_i32_1 = arith.constant 0 : i32
    return %c0_i32, %c0_i32_0 : i32, i32
  }
  func.func @transform_2(%arg0: i32) -> (i32, i32) {
    %c0_i32 = arith.constant 0 : i32
    %c0_i32_0 = arith.constant 0 : i32
    %c0_i32_1 = arith.constant 0 : i32
    return %c0_i32, %c0_i32_0 : i32, i32
  }
  func.func @transform_3(%arg0: i32) -> (i32, i32, i32) {
    %c0_i32 = arith.constant 0 : i32
    %c0_i32_0 = arith.constant 0 : i32
    %c0_i32_1 = arith.constant 0 : i32
    %c0_i32_2 = arith.constant 0 : i32
    return %c0_i32, %c0_i32_0, %c0_i32_1 : i32, i32, i32
  }
  func.func @transform_4(%arg0: i32) -> (i32, i32, i32) {
    %c0_i32 = arith.constant 0 : i32
    %c0_i32_0 = arith.constant 0 : i32
    %c0_i32_1 = arith.constant 0 : i32
    %c0_i32_2 = arith.constant 0 : i32
    return %c0_i32, %c0_i32_0, %c0_i32_1 : i32, i32, i32
  }
  func.func @transform_5(%arg0: i32) -> (i32, i32) {
    %c0_i32 = arith.constant 0 : i32
    %c0_i32_0 = arith.constant 0 : i32
    %c0_i32_1 = arith.constant 0 : i32
    return %c0_i32, %c0_i32_0 : i32, i32
  }
  func.func @transform_6(%arg0: i32) -> (i32, i32) {
    %c0_i32 = arith.constant 0 : i32
    %c0_i32_0 = arith.constant 0 : i32
    %c0_i32_1 = arith.constant 0 : i32
    return %c0_i32, %c0_i32_0 : i32, i32
  }
  func.func @transform_7(%arg0: i32) -> (i32, i32) {
    %c0_i32 = arith.constant 0 : i32
    %c0_i32_0 = arith.constant 0 : i32
    return %arg0, %c0_i32 : i32, i32
  }
}

</mosaic_0001>

<llo_original>
// kernel: tpu_custom_call.1
$region0: #{tpu_custom_call.1}
  #allocation0 [shape = 'u32[]', space=smem, size = 0x4, offset = 0x4, fixed_abs, tag = 'smem constant byte address 0x4 - core index']
  #allocation1 [shape = 'u32[144,128]{1,0:T(1,128)}', space=vmem, size = 0x12000, scoped, tag = 'internal scratch']
  %s0 = inlined_call_operand.hbm [shape: f32[8,128], index: 0, kind: input, shape index: {}]
  %s1 = inlined_call_operand.hbm [shape: f32[128,128], index: 1, kind: input, shape index: {}]
  %s2 = inlined_call_operand.vmem [shape: f32[1,128], index: 2, kind: input, shape index: {}]
  %s3 = inlined_call_operand.hbm [shape: f32[2,128,128], index: 3, kind: input, shape index: {}]
  %s4 = inlined_call_operand.vmem [shape: f32[2,1,128], index: 4, kind: input, shape index: {}]
  %s5 = inlined_call_operand.hbm [shape: f32[128,128], index: 5, kind: input, shape index: {}]
  %s6 = inlined_call_operand.vmem [shape: f32[1,128], index: 6, kind: input, shape index: {}]
  %s7 = inlined_call_operand.hbm [shape: f32[8,128], index: 7, kind: output, shape index: {}]
  %s8 = sld [smem:[#allocation0]]
  $region54: #{tpu_custom_call.1} parent=0
    _
  %s10 = ssub.s32 1, %s8
  %s11 = scalar_select 0, %s10, %s8
  $region1: #{tpu_custom_call.1} parent=0
    #allocation2 [shape = 'u8[4096]{0}', space=vmem, size = 0x1000, scoped, tag = 'input window, operand 0, single buffered']
    #allocation3 [shape = 's32[1]{0}', space=sflag, size = 0x4, scoped, tag = 'scoped memory for tpu_custom_call.1']
    #allocation4 [shape = 's32[1]{0}', space=sflag, size = 0x4, scoped, tag = 'scoped memory for tpu_custom_call.1']
    #allocation5 [shape = 'u8[65536]{0}', space=vmem, size = 0x10000, scoped, tag = 'input window, operand 1, single buffered']
    #allocation6 [shape = 's32[1]{0}', space=sflag, size = 0x4, scoped, tag = 'scoped memory for tpu_custom_call.1']
    #allocation7 [shape = 'u8[131072]{0}', space=vmem, size = 0x20000, scoped, tag = 'input window, operand 3, single buffered']
    #allocation8 [shape = 'u8[65536]{0}', space=vmem, size = 0x10000, scoped, tag = 'input window, operand 5, single buffered']
    #allocation9 [shape = 's32[1]{0}', space=sflag, size = 0x4, scoped, tag = 'scoped memory for tpu_custom_call.1']
    #allocation10 [shape = 'u8[4096]{0}', space=vmem, size = 0x1000, scoped, tag = 'output window, operand 0, single buffered']
    %12 = vsyncpa [#allocation3], 0
    %13 = vsyncpa [#allocation6], 0
    %14 = vsyncpa [#allocation9], 0
    %15 = vsyncpa [#allocation4], 0
    // Predicated region
    $region2: #{tpu_custom_call.1} parent=1 // pred_check
      _
    $region3: #{tpu_custom_call.1} parent=1 // pred_check_branch
      %17 = sbr.rel (0) target = $region5
    $region4: #{tpu_custom_call.1} parent=1 // pred_region
      %s19 = ssub.s32 128, 128
      %20 = vsyncadd [#allocation3], %s19
      %s22 = sshll.u32 [#allocation2], 4
      %s23 = int_to_ptr.vmem [resolvable:$true] %s22
      %25 = dma.hbm_to_vmem [thread:$0]  %s0, 128, %s23, [#allocation3]
    $region5: #{tpu_custom_call.1} parent=1 // pred_fallthru
      _
    // Predicated region
    $region6: #{tpu_custom_call.1} parent=1 // pred_check
      _
    $region7: #{tpu_custom_call.1} parent=1 // pred_check_branch
      %27 = sbr.rel (0) target = $region9
    $region8: #{tpu_custom_call.1} parent=1 // pred_region
      %s29 = ssub.s32 2048, 2048
      %30 = vsyncadd [#allocation6], %s29
      %s31 = sshll.u32 [#allocation5], 4
      %s32 = int_to_ptr.vmem [resolvable:$true] %s31
      %37 = dma.hbm_to_vmem [thread:$0]  %s1, 2048, %s32, [#allocation6], 128, 128, 8
    $region9: #{tpu_custom_call.1} parent=1 // pred_fallthru
      _
    // Predicated region
    $region10: #{tpu_custom_call.1} parent=1 // pred_check
      _
    $region11: #{tpu_custom_call.1} parent=1 // pred_check_branch
      %39 = sbr.rel (0) target = $region13
    $region12: #{tpu_custom_call.1} parent=1 // pred_region
      _
    $region13: #{tpu_custom_call.1} parent=1 // pred_fallthru
      _
    // Predicated region
    $region14: #{tpu_custom_call.1} parent=1 // pred_check
      _
    $region15: #{tpu_custom_call.1} parent=1 // pred_check_branch
      %41 = sbr.rel (0) target = $region17
    $region16: #{tpu_custom_call.1} parent=1 // pred_region
      %s43 = ssub.s32 4096, 4096
      %44 = vsyncadd [#allocation6], %s43
      %s45 = sshll.u32 [#allocation7], 4
      %s46 = int_to_ptr.vmem [resolvable:$true] %s45
      %51 = dma.hbm_to_vmem [thread:$0]  %s3, 4096, %s46, [#allocation6], 128, 128, 8
    $region17: #{tpu_custom_call.1} parent=1 // pred_fallthru
      _
    // Predicated region
    $region18: #{tpu_custom_call.1} parent=1 // pred_check
      _
    $region19: #{tpu_custom_call.1} parent=1 // pred_check_branch
      %53 = sbr.rel (0) target = $region21
    $region20: #{tpu_custom_call.1} parent=1 // pred_region
      _
    $region21: #{tpu_custom_call.1} parent=1 // pred_fallthru
      _
    // Predicated region
    $region22: #{tpu_custom_call.1} parent=1 // pred_check
      _
    $region23: #{tpu_custom_call.1} parent=1 // pred_check_branch
      %55 = sbr.rel (0) target = $region25
    $region24: #{tpu_custom_call.1} parent=1 // pred_region
      %s57 = ssub.s32 2048, 2048
      %58 = vsyncadd [#allocation9], %s57
      %s59 = sshll.u32 [#allocation8], 4
      %s60 = int_to_ptr.vmem [resolvable:$true] %s59
      %65 = dma.hbm_to_vmem [thread:$0]  %s5, 2048, %s60, [#allocation9], 128, 128, 8
    $region25: #{tpu_custom_call.1} parent=1 // pred_fallthru
      _
    // Predicated region
    $region26: #{tpu_custom_call.1} parent=1 // pred_check
      _
    $region27: #{tpu_custom_call.1} parent=1 // pred_check_branch
      %67 = sbr.rel (0) target = $region29
    $region28: #{tpu_custom_call.1} parent=1 // pred_region
      _
    $region29: #{tpu_custom_call.1} parent=1 // pred_fallthru
      _
    // Predicated region
    $region30: #{tpu_custom_call.1} parent=1 // pred_check
      _
    $region31: #{tpu_custom_call.1} parent=1 // pred_check_branch
      %69 = sbr.rel (0) target = $region33
    $region32: #{tpu_custom_call.1} parent=1 // pred_region
      %70 = dma.done [#allocation3], 128
    $region33: #{tpu_custom_call.1} parent=1 // pred_fallthru
      _
    // Predicated region
    $region34: #{tpu_custom_call.1} parent=1 // pred_check
      _
    $region35: #{tpu_custom_call.1} parent=1 // pred_check_branch
      %72 = sbr.rel (0) target = $region37
    $region36: #{tpu_custom_call.1} parent=1 // pred_region
      %73 = dma.done [#allocation6], 2048
    $region37: #{tpu_custom_call.1} parent=1 // pred_fallthru
      _
    // Predicated region
    $region38: #{tpu_custom_call.1} parent=1 // pred_check
      _
    $region39: #{tpu_custom_call.1} parent=1 // pred_check_branch
      %75 = sbr.rel (0) target = $region41
    $region40: #{tpu_custom_call.1} parent=1 // pred_region
      %76 = dma.done [#allocation6], 4096
    $region41: #{tpu_custom_call.1} parent=1 // pred_fallthru
      _
    // Predicated region
    $region42: #{tpu_custom_call.1} parent=1 // pred_check
      _
    $region43: #{tpu_custom_call.1} parent=1 // pred_check_branch
      %78 = sbr.rel (0) target = $region45
    $region44: #{tpu_custom_call.1} parent=1 // pred_region
      %79 = dma.done [#allocation9], 2048
    $region45: #{tpu_custom_call.1} parent=1 // pred_fallthru
      _
    %v80 = vld [vmem:[#allocation2] sm:$0xff]
    %v81 = vld [vmem:[#allocation5] sm:$0xff]
    %v82 = vld [vmem:[#allocation5 + $0x8] sm:$0xff]
    %v83 = vld [vmem:[#allocation5 + $0x10] sm:$0xff]
    %v84 = vld [vmem:[#allocation5 + $0x18] sm:$0xff]
    %v85 = vld [vmem:[#allocation5 + $0x20] sm:$0xff]
    %v86 = vld [vmem:[#allocation5 + $0x28] sm:$0xff]
    %v87 = vld [vmem:[#allocation5 + $0x30] sm:$0xff]
    %v88 = vld [vmem:[#allocation5 + $0x38] sm:$0xff]
    %v89 = vld [vmem:[#allocation5 + $0x40] sm:$0xff]
    %v90 = vld [vmem:[#allocation5 + $0x48] sm:$0xff]
    %v91 = vld [vmem:[#allocation5 + $0x50] sm:$0xff]
    %v92 = vld [vmem:[#allocation5 + $0x58] sm:$0xff]
    %v93 = vld [vmem:[#allocation5 + $0x60] sm:$0xff]
    %v94 = vld [vmem:[#allocation5 + $0x68] sm:$0xff]
    %v95 = vld [vmem:[#allocation5 + $0x70] sm:$0xff]
    %v96 = vld [vmem:[#allocation5 + $0x78] sm:$0xff]
    %v97 = vld [vmem:[%s2] sm:$0x1]
    %v99 = vlaneseq
    %v100 = vshrl.u32 %v99, 7
    %v101 = vsub.s32 0, %v100
    %v102 = vrot.slane %v97, %v101
    %104 = vmatprep.subr.mxu0 0.0
    %105 = vmatpush1.msra.mxu0 %v96
    %106 = vmatprep.subr.mxu0 0.0
    %107 = vmatpush1.msra.mxu0 %v95
    %108 = vmatprep.subr.mxu0 0.0
    %109 = vmatpush1.msra.mxu0 %v94
    %110 = vmatprep.subr.mxu0 0.0
    %111 = vmatpush1.msra.mxu0 %v93
    %112 = vmatprep.subr.mxu0 0.0
    %113 = vmatpush1.msra.mxu0 %v92
    %114 = vmatprep.subr.mxu0 0.0
    %115 = vmatpush1.msra.mxu0 %v91
    %116 = vmatprep.subr.mxu0 0.0
    %117 = vmatpush1.msra.mxu0 %v90
    %118 = vmatprep.subr.mxu0 0.0
    %119 = vmatpush1.msra.mxu0 %v89
    %120 = vmatprep.subr.mxu0 0.0
    %121 = vmatpush1.msra.mxu0 %v88
    %122 = vmatprep.subr.mxu0 0.0
    %123 = vmatpush1.msra.mxu0 %v87
    %124 = vmatprep.subr.mxu0 0.0
    %125 = vmatpush1.msra.mxu0 %v86
    %126 = vmatprep.subr.mxu0 0.0
    %127 = vmatpush1.msra.mxu0 %v85
    %128 = vmatprep.subr.mxu0 0.0
    %129 = vmatpush1.msra.mxu0 %v84
    %130 = vmatprep.subr.mxu0 0.0
    %131 = vmatpush1.msra.mxu0 %v83
    %132 = vmatprep.subr.mxu0 0.0
    %133 = vmatpush1.msra.mxu0 %v82
    %134 = vmatprep.subr.mxu0 0.0
    %135 = vmatpush1.msra.mxu0 %v81
    %136 = vmatprep.subr.mxu0 0.0
    %137 = vmatpush2.msra.mxu0 0.0
    %138 = vmatprep.subr.mxu0 0.0
    %139 = vmatpush2.msra.mxu0 0.0
    %140 = vmatprep.subr.mxu0 0.0
    %141 = vmatpush2.msra.mxu0 0.0
    %142 = vmatprep.subr.mxu0 0.0
    %143 = vmatpush2.msra.mxu0 0.0
    %144 = vmatprep.subr.mxu0 0.0
    %145 = vmatpush2.msra.mxu0 0.0
    %146 = vmatprep.subr.mxu0 0.0
    %147 = vmatpush2.msra.mxu0 0.0
    %148 = vmatprep.subr.mxu0 0.0
    %149 = vmatpush2.msra.mxu0 0.0
    %150 = vmatprep.subr.mxu0 0.0
    %151 = vmatpush2.msra.mxu0 0.0
    %152 = vmatprep.subr.mxu0 0.0
    %153 = vmatpush2.msra.mxu0 0.0
    %154 = vmatprep.subr.mxu0 0.0
    %155 = vmatpush2.msra.mxu0 0.0
    %156 = vmatprep.subr.mxu0 0.0
    %157 = vmatpush2.msra.mxu0 0.0
    %158 = vmatprep.subr.mxu0 0.0
    %159 = vmatpush2.msra.mxu0 0.0
    %160 = vmatprep.subr.mxu0 0.0
    %161 = vmatpush2.msra.mxu0 0.0
    %162 = vmatprep.subr.mxu0 0.0
    %163 = vmatpush2.msra.mxu0 0.0
    %164 = vmatprep.subr.mxu0 0.0
    %165 = vmatpush2.msra.mxu0 0.0
    %166 = vmatprep.subr.mxu0 0.0
    %167 = vmatpush2.msra.mxu0 0.0
    %168 = vmatprep.mubr.f32.mxu0 0.0
    %169 = vmatmul.mubr.f32.gmra.mxu0 %v80
    %v170 = vpop.f32.mrf.mxu0
    %v171 = vadd.f32 %v102, %v170
    %v172 = vpop.f32.mrf.mxu0
    %173 = vdwg.mxu0
    %v174 = vmax.f32 %v171, 0.0
    %v175 = vld [vmem:[#allocation7] sm:$0xff]
    %v176 = vld [vmem:[#allocation7 + $0x8] sm:$0xff]
    %v177 = vld [vmem:[#allocation7 + $0x10] sm:$0xff]
    %v178 = vld [vmem:[#allocation7 + $0x18] sm:$0xff]
    %v179 = vld [vmem:[#allocation7 + $0x20] sm:$0xff]
    %v180 = vld [vmem:[#allocation7 + $0x28] sm:$0xff]
    %v181 = vld [vmem:[#allocation7 + $0x30] sm:$0xff]
    %v182 = vld [vmem:[#allocation7 + $0x38] sm:$0xff]
    %v183 = vld [vmem:[#allocation7 + $0x40] sm:$0xff]
    %v184 = vld [vmem:[#allocation7 + $0x48] sm:$0xff]
    %v185 = vld [vmem:[#allocation7 + $0x50] sm:$0xff]
    %v186 = vld [vmem:[#allocation7 + $0x58] sm:$0xff]
    %v187 = vld [vmem:[#allocation7 + $0x60] sm:$0xff]
    %v188 = vld [vmem:[#allocation7 + $0x68] sm:$0xff]
    %v189 = vld [vmem:[#allocation7 + $0x70] sm:$0xff]
    %v190 = vld [vmem:[#allocation7 + $0x78] sm:$0xff]
    %v191 = vld [vmem:[%s4] sm:$0x1]
    %v193 = vlaneseq
    %v194 = vshrl.u32 %v193, 7
    %v195 = vsub.s32 0, %v194
    %v196 = vrot.slane %v191, %v195
    %198 = vmatprep.subr.mxu0 0.0
    %199 = vmatpush1.msra.mxu0 %v190
    %200 = vmatprep.subr.mxu0 0.0
    %201 = vmatpush1.msra.mxu0 %v189
    %202 = vmatprep.subr.mxu0 0.0
    %203 = vmatpush1.msra.mxu0 %v188
    %204 = vmatprep.subr.mxu0 0.0
    %205 = vmatpush1.msra.mxu0 %v187
    %206 = vmatprep.subr.mxu0 0.0
    %207 = vmatpush1.msra.mxu0 %v186
    %208 = vmatprep.subr.mxu0 0.0
    %209 = vmatpush1.msra.mxu0 %v185
    %210 = vmatprep.subr.mxu0 0.0
    %211 = vmatpush1.msra.mxu0 %v184
    %212 = vmatprep.subr.mxu0 0.0
    %213 = vmatpush1.msra.mxu0 %v183
    %214 = vmatprep.subr.mxu0 0.0
    %215 = vmatpush1.msra.mxu0 %v182
    %216 = vmatprep.subr.mxu0 0.0
    %217 = vmatpush1.msra.mxu0 %v181
    %218 = vmatprep.subr.mxu0 0.0
    %219 = vmatpush1.msra.mxu0 %v180
    %220 = vmatprep.subr.mxu0 0.0
    %221 = vmatpush1.msra.mxu0 %v179
    %222 = vmatprep.subr.mxu0 0.0
    %223 = vmatpush1.msra.mxu0 %v178
    %224 = vmatprep.subr.mxu0 0.0
    %225 = vmatpush1.msra.mxu0 %v177
    %226 = vmatprep.subr.mxu0 0.0
    %227 = vmatpush1.msra.mxu0 %v176
    %228 = vmatprep.subr.mxu0 0.0
    %229 = vmatpush1.msra.mxu0 %v175
    %230 = vmatprep.subr.mxu0 0.0
    %231 = vmatpush2.msra.mxu0 0.0
    %232 = vmatprep.subr.mxu0 0.0
    %233 = vmatpush2.msra.mxu0 0.0
    %234 = vmatprep.subr.mxu0 0.0
    %235 = vmatpush2.msra.mxu0 0.0
    %236 = vmatprep.subr.mxu0 0.0
    %237 = vmatpush2.msra.mxu0 0.0
    %238 = vmatprep.subr.mxu0 0.0
    %239 = vmatpush2.msra.mxu0 0.0
    %240 = vmatprep.subr.mxu0 0.0
    %241 = vmatpush2.msra.mxu0 0.0
    %242 = vmatprep.subr.mxu0 0.0
    %243 = vmatpush2.msra.mxu0 0.0
    %244 = vmatprep.subr.mxu0 0.0
    %245 = vmatpush2.msra.mxu0 0.0
    %246 = vmatprep.subr.mxu0 0.0
    %247 = vmatpush2.msra.mxu0 0.0
    %248 = vmatprep.subr.mxu0 0.0
    %249 = vmatpush2.msra.mxu0 0.0
    %250 = vmatprep.subr.mxu0 0.0
    %251 = vmatpush2.msra.mxu0 0.0
    %252 = vmatprep.subr.mxu0 0.0
    %253 = vmatpush2.msra.mxu0 0.0
    %254 = vmatprep.subr.mxu0 0.0
    %255 = vmatpush2.msra.mxu0 0.0
    %256 = vmatprep.subr.mxu0 0.0
    %257 = vmatpush2.msra.mxu0 0.0
    %258 = vmatprep.subr.mxu0 0.0
    %259 = vmatpush2.msra.mxu0 0.0
    %260 = vmatprep.subr.mxu0 0.0
    %261 = vmatpush2.msra.mxu0 0.0
    %262 = vmatprep.mubr.f32.mxu0 0.0
    %263 = vmatmul.mubr.f32.gmra.mxu0 %v174
    %v264 = vpop.f32.mrf.mxu0
    %v265 = vadd.f32 %v196, %v264
    %v266 = vpop.f32.mrf.mxu0
    %267 = vdwg.mxu0
    %v268 = vmax.f32 %v265, 0.0
    %s269 = scalar_lea.vmem [#allocation7], 128
    %v270 = vld [vmem:[%s269] sm:$0xff]
    %v271 = vld [vmem:[%s269 + $0x8] sm:$0xff]
    %v272 = vld [vmem:[%s269 + $0x10] sm:$0xff]
    %v273 = vld [vmem:[%s269 + $0x18] sm:$0xff]
    %v274 = vld [vmem:[%s269 + $0x20] sm:$0xff]
    %v275 = vld [vmem:[%s269 + $0x28] sm:$0xff]
    %v276 = vld [vmem:[%s269 + $0x30] sm:$0xff]
    %v277 = vld [vmem:[%s269 + $0x38] sm:$0xff]
    %v278 = vld [vmem:[%s269 + $0x40] sm:$0xff]
    %v279 = vld [vmem:[%s269 + $0x48] sm:$0xff]
    %v280 = vld [vmem:[%s269 + $0x50] sm:$0xff]
    %v281 = vld [vmem:[%s269 + $0x58] sm:$0xff]
    %v282 = vld [vmem:[%s269 + $0x60] sm:$0xff]
    %v283 = vld [vmem:[%s269 + $0x68] sm:$0xff]
    %v284 = vld [vmem:[%s269 + $0x70] sm:$0xff]
    %v285 = vld [vmem:[%s269 + $0x78] sm:$0xff]
    %s286 = scalar_lea.vmem %s4, 1
    %v287 = vld [vmem:[%s286] sm:$0x1]
    %v289 = vlaneseq
    %v290 = vshrl.u32 %v289, 7
    %v291 = vsub.s32 0, %v290
    %v292 = vrot.slane %v287, %v291
    %294 = vmatprep.subr.mxu0 0.0
    %295 = vmatpush1.msra.mxu0 %v285
    %296 = vmatprep.subr.mxu0 0.0
    %297 = vmatpush1.msra.mxu0 %v284
    %298 = vmatprep.subr.mxu0 0.0
    %299 = vmatpush1.msra.mxu0 %v283
    %300 = vmatprep.subr.mxu0 0.0
    %301 = vmatpush1.msra.mxu0 %v282
    %302 = vmatprep.subr.mxu0 0.0
    %303 = vmatpush1.msra.mxu0 %v281
    %304 = vmatprep.subr.mxu0 0.0
    %305 = vmatpush1.msra.mxu0 %v280
    %306 = vmatprep.subr.mxu0 0.0
    %307 = vmatpush1.msra.mxu0 %v279
    %308 = vmatprep.subr.mxu0 0.0
    %309 = vmatpush1.msra.mxu0 %v278
    %310 = vmatprep.subr.mxu0 0.0
    %311 = vmatpush1.msra.mxu0 %v277
    %312 = vmatprep.subr.mxu0 0.0
    %313 = vmatpush1.msra.mxu0 %v276
    %314 = vmatprep.subr.mxu0 0.0
    %315 = vmatpush1.msra.mxu0 %v275
    %316 = vmatprep.subr.mxu0 0.0
    %317 = vmatpush1.msra.mxu0 %v274
    %318 = vmatprep.subr.mxu0 0.0
    %319 = vmatpush1.msra.mxu0 %v273
    %320 = vmatprep.subr.mxu0 0.0
    %321 = vmatpush1.msra.mxu0 %v272
    %322 = vmatprep.subr.mxu0 0.0
    %323 = vmatpush1.msra.mxu0 %v271
    %324 = vmatprep.subr.mxu0 0.0
    %325 = vmatpush1.msra.mxu0 %v270
    %326 = vmatprep.subr.mxu0 0.0
    %327 = vmatpush2.msra.mxu0 0.0
    %328 = vmatprep.subr.mxu0 0.0
    %329 = vmatpush2.msra.mxu0 0.0
    %330 = vmatprep.subr.mxu0 0.0
    %331 = vmatpush2.msra.mxu0 0.0
    %332 = vmatprep.subr.mxu0 0.0
    %333 = vmatpush2.msra.mxu0 0.0
    %334 = vmatprep.subr.mxu0 0.0
    %335 = vmatpush2.msra.mxu0 0.0
    %336 = vmatprep.subr.mxu0 0.0
    %337 = vmatpush2.msra.mxu0 0.0
    %338 = vmatprep.subr.mxu0 0.0
    %339 = vmatpush2.msra.mxu0 0.0
    %340 = vmatprep.subr.mxu0 0.0
    %341 = vmatpush2.msra.mxu0 0.0
    %342 = vmatprep.subr.mxu0 0.0
    %343 = vmatpush2.msra.mxu0 0.0
    %344 = vmatprep.subr.mxu0 0.0
    %345 = vmatpush2.msra.mxu0 0.0
    %346 = vmatprep.subr.mxu0 0.0
    %347 = vmatpush2.msra.mxu0 0.0
    %348 = vmatprep.subr.mxu0 0.0
    %349 = vmatpush2.msra.mxu0 0.0
    %350 = vmatprep.subr.mxu0 0.0
    %351 = vmatpush2.msra.mxu0 0.0
    %352 = vmatprep.subr.mxu0 0.0
    %353 = vmatpush2.msra.mxu0 0.0
    %354 = vmatprep.subr.mxu0 0.0
    %355 = vmatpush2.msra.mxu0 0.0
    %356 = vmatprep.subr.mxu0 0.0
    %357 = vmatpush2.msra.mxu0 0.0
    %358 = vmatprep.mubr.f32.mxu0 0.0
    %359 = vmatmul.mubr.f32.gmra.mxu0 %v268
    %v360 = vpop.f32.mrf.mxu0
    %v361 = vadd.f32 %v292, %v360
    %v362 = vpop.f32.mrf.mxu0
    %363 = vdwg.mxu0
    %v364 = vmax.f32 %v361, 0.0
    %v365 = vld [vmem:[#allocation8] sm:$0xff]
    %v366 = vld [vmem:[#allocation8 + $0x8] sm:$0xff]
    %v367 = vld [vmem:[#allocation8 + $0x10] sm:$0xff]
    %v368 = vld [vmem:[#allocation8 + $0x18] sm:$0xff]
    %v369 = vld [vmem:[#allocation8 + $0x20] sm:$0xff]
    %v370 = vld [vmem:[#allocation8 + $0x28] sm:$0xff]
    %v371 = vld [vmem:[#allocation8 + $0x30] sm:$0xff]
    %v372 = vld [vmem:[#allocation8 + $0x38] sm:$0xff]
    %v373 = vld [vmem:[#allocation8 + $0x40] sm:$0xff]
    %v374 = vld [vmem:[#allocation8 + $0x48] sm:$0xff]
    %v375 = vld [vmem:[#allocation8 + $0x50] sm:$0xff]
    %v376 = vld [vmem:[#allocation8 + $0x58] sm:$0xff]
    %v377 = vld [vmem:[#allocation8 + $0x60] sm:$0xff]
    %v378 = vld [vmem:[#allocation8 + $0x68] sm:$0xff]
    %v379 = vld [vmem:[#allocation8 + $0x70] sm:$0xff]
    %v380 = vld [vmem:[#allocation8 + $0x78] sm:$0xff]
    %v381 = vld [vmem:[%s6] sm:$0x1]
    %v383 = vlaneseq
    %v384 = vshrl.u32 %v383, 7
    %v385 = vsub.s32 0, %v384
    %v386 = vrot.slane %v381, %v385
    %388 = vmatprep.subr.mxu0 0.0
    %389 = vmatpush1.msra.mxu0 %v380
    %390 = vmatprep.subr.mxu0 0.0
    %391 = vmatpush1.msra.mxu0 %v379
    %392 = vmatprep.subr.mxu0 0.0
    %393 = vmatpush1.msra.mxu0 %v378
    %394 = vmatprep.subr.mxu0 0.0
    %395 = vmatpush1.msra.mxu0 %v377
    %396 = vmatprep.subr.mxu0 0.0
    %397 = vmatpush1.msra.mxu0 %v376
    %398 = vmatprep.subr.mxu0 0.0
    %399 = vmatpush1.msra.mxu0 %v375
    %400 = vmatprep.subr.mxu0 0.0
    %401 = vmatpush1.msra.mxu0 %v374
    %402 = vmatprep.subr.mxu0 0.0
    %403 = vmatpush1.msra.mxu0 %v373
    %404 = vmatprep.subr.mxu0 0.0
    %405 = vmatpush1.msra.mxu0 %v372
    %406 = vmatprep.subr.mxu0 0.0
    %407 = vmatpush1.msra.mxu0 %v371
    %408 = vmatprep.subr.mxu0 0.0
    %409 = vmatpush1.msra.mxu0 %v370
    %410 = vmatprep.subr.mxu0 0.0
    %411 = vmatpush1.msra.mxu0 %v369
    %412 = vmatprep.subr.mxu0 0.0
    %413 = vmatpush1.msra.mxu0 %v368
    %414 = vmatprep.subr.mxu0 0.0
    %415 = vmatpush1.msra.mxu0 %v367
    %416 = vmatprep.subr.mxu0 0.0
    %417 = vmatpush1.msra.mxu0 %v366
    %418 = vmatprep.subr.mxu0 0.0
    %419 = vmatpush1.msra.mxu0 %v365
    %420 = vmatprep.subr.mxu0 0.0
    %421 = vmatpush2.msra.mxu0 0.0
    %422 = vmatprep.subr.mxu0 0.0
    %423 = vmatpush2.msra.mxu0 0.0
    %424 = vmatprep.subr.mxu0 0.0
    %425 = vmatpush2.msra.mxu0 0.0
    %426 = vmatprep.subr.mxu0 0.0
    %427 = vmatpush2.msra.mxu0 0.0
    %428 = vmatprep.subr.mxu0 0.0
    %429 = vmatpush2.msra.mxu0 0.0
    %430 = vmatprep.subr.mxu0 0.0
    %431 = vmatpush2.msra.mxu0 0.0
    %432 = vmatprep.subr.mxu0 0.0
    %433 = vmatpush2.msra.mxu0 0.0
    %434 = vmatprep.subr.mxu0 0.0
    %435 = vmatpush2.msra.mxu0 0.0
    %436 = vmatprep.subr.mxu0 0.0
    %437 = vmatpush2.msra.mxu0 0.0
    %438 = vmatprep.subr.mxu0 0.0
    %439 = vmatpush2.msra.mxu0 0.0
    %440 = vmatprep.subr.mxu0 0.0
    %441 = vmatpush2.msra.mxu0 0.0
    %442 = vmatprep.subr.mxu0 0.0
    %443 = vmatpush2.msra.mxu0 0.0
    %444 = vmatprep.subr.mxu0 0.0
    %445 = vmatpush2.msra.mxu0 0.0
    %446 = vmatprep.subr.mxu0 0.0
    %447 = vmatpush2.msra.mxu0 0.0
    %448 = vmatprep.subr.mxu0 0.0
    %449 = vmatpush2.msra.mxu0 0.0
    %450 = vmatprep.subr.mxu0 0.0
    %451 = vmatpush2.msra.mxu0 0.0
    %452 = vmatprep.mubr.f32.mxu0 0.0
    %453 = vmatmul.mubr.f32.gmra.mxu0 %v364
    %v454 = vpop.f32.mrf.mxu0
    %v455 = vadd.f32 %v386, %v454
    %v456 = vpop.f32.mrf.mxu0
    %457 = vdwg.mxu0
    %458 = vst [vmem:[#allocation10] sm:$0xff] %v455
    // Predicated region
    $region46: #{tpu_custom_call.1} parent=1 // pred_check
      _
    $region47: #{tpu_custom_call.1} parent=1 // pred_check_branch
      %460 = sbr.rel (0) target = $region49
    $region48: #{tpu_custom_call.1} parent=1 // pred_region
      %s462 = ssub.s32 128, 128
      %463 = vsyncadd [#allocation4], %s462
      %s465 = sshll.u32 [#allocation10], 4
      %s466 = int_to_ptr.vmem [resolvable:$true] %s465
      %468 = dma.vmem_to_hbm [thread:$0]  %s466, 128, %s7, [#allocation4]
    $region49: #{tpu_custom_call.1} parent=1 // pred_fallthru
      _
    // Predicated region
    $region50: #{tpu_custom_call.1} parent=1 // pred_check
      _
    $region51: #{tpu_custom_call.1} parent=1 // pred_check_branch
      %470 = sbr.rel (0) target = $region53
    $region52: #{tpu_custom_call.1} parent=1 // pred_region
      %471 = dma.done [#allocation4], 128
    $region53: #{tpu_custom_call.1} parent=1 // pred_fallthru
      _
    %472 = vsyncpa [#allocation3], 1
    %473 = vsyncpa [#allocation6], 1
    %474 = vsyncpa [#allocation9], 1
    %475 = vsyncpa [#allocation4], 1

</llo_original>
